<compile_context>
chip_gen: v5e
topology: v5e:2x2
jax: 0.10.0
libtpu: 0.0.40
codegen_flags: <defaults>
</compile_context>

<pallas_src>
import jax
import jax.numpy as jnp
from jax import lax
from jax.experimental import pallas as pl
from jax.experimental.pallas import tpu as pltpu


def _round_up(x, m):
    return ((x + m - 1) // m) * m


def _linear_mask_kernel(x_ref, w_ref, b_ref, h_ref, o_ref, acc_ref):
    # x_ref: (TM, TK) activations        w_ref: (TN, TK) weight (torch layout)
    # b_ref: (1, TN)  bias               h_ref: (TM, 1)  holder (int32)
    # o_ref: (TM, TN) output             acc_ref: (TM, TN) f32 accumulator
    k = pl.program_id(2)

    @pl.when(k == 0)
    def _init():
        # Fold the bias into the accumulator init (one broadcast per tile).
        acc_ref[...] = jnp.broadcast_to(
            b_ref[...].astype(jnp.float32), acc_ref.shape)

    # x @ w.T on the MXU: contract x dim 1 (K) with w dim 1 (K).
    acc_ref[...] += lax.dot_general(
        x_ref[...], w_ref[...],
        dimension_numbers=(((1,), (1,)), ((), ())),
        preferred_element_type=jnp.float32)

    @pl.when(k == pl.num_programs(2) - 1)
    def _finalize():
        keep = h_ref[...] != 0                      # (TM, 1) -> broadcasts over N
        o_ref[...] = jnp.where(keep, acc_ref[...], 0.0).astype(o_ref.dtype)


def _pick_tiles(M, N, K):
    # Row tile: large for streaming, 8-aligned for small problems.
    tm = 512 if M >= 512 else _round_up(M, 8)
    # Col / reduction tiles: 256-aligned for the 256-wide MXU (v6e/v7x),
    # falling back to 128-aligned (v5e-friendly, still lane-dense) when small.
    tn = 256 if N >= 256 else _round_up(N, 128)
    tk = 256 if K >= 256 else _round_up(K, 128)
    return tm, tn, tk


def linear_layer_forward(holder, info, weight, bias):
    """Pallas implementation of LinearLayer.forward.

    holder: (B, S) integer tensor; rows with holder == 0 are zeroed.
    info:   (B, S, input_size) float32
    weight: (output_size, input_size) float32  (torch nn.Linear convention)
    bias:   (output_size,) float32
    returns (holder, out) with out shape (B, S, output_size)
    """
    B, S, K = info.shape
    N, Kw = weight.shape
    assert Kw == K
    M = B * S

    TM, TN, TK = _pick_tiles(M, N, K)
    Mp = _round_up(M, TM)
    Np = _round_up(N, TN)
    Kp = _round_up(K, TK)

    # Flatten + zero-pad to tile-aligned shapes (zero pads are exact: padded K
    # contributes nothing, padded M/N rows/cols are sliced off below).
    x2d = info.reshape(M, K)
    x2d = jnp.pad(x2d, ((0, Mp - M), (0, Kp - K)))
    w2d = jnp.pad(weight, ((0, Np - N), (0, Kp - K)))          # keep (N, K) layout
    b2d = jnp.pad(bias, (0, Np - N)).reshape(1, Np)
    h2d = jnp.pad(holder.reshape(M).astype(jnp.int32), (0, Mp - M)).reshape(Mp, 1)

    grid = (Mp // TM, Np // TN, Kp // TK)

    out2d = pl.pallas_call(
        _linear_mask_kernel,
        out_shape=jax.ShapeDtypeStruct((Mp, Np), info.dtype),
        grid_spec=pltpu.PrefetchScalarGridSpec(
            num_scalar_prefetch=0,
            grid=grid,
            in_specs=[
                pl.BlockSpec((TM, TK), lambda i, j, k: (i, k)),   # x
                pl.BlockSpec((TN, TK), lambda i, j, k: (j, k)),   # weight (N, K)
                pl.BlockSpec((1, TN), lambda i, j, k: (0, j)),    # bias
                pl.BlockSpec((TM, 1), lambda i, j, k: (i, 0)),    # holder
            ],
            out_specs=pl.BlockSpec((TM, TN), lambda i, j, k: (i, j)),
            scratch_shapes=[pltpu.VMEM((TM, TN), jnp.float32)],
        ),
        compiler_params=pltpu.CompilerParams(
            dimension_semantics=("parallel", "parallel", "arbitrary")),
    )(x2d, w2d, b2d, h2d)

    out = out2d[:M, :N].reshape(B, S, N)
    return holder, out


def _reference(holder, info, weight, bias):
    ref = info @ weight.T + bias
    return jnp.where((holder == 0)[..., None], 0.0, ref)


if __name__ == "__main__":
    key = jax.random.PRNGKey(0)
    initrange = 0.1

    # --- Test 1: small shapes (B=2, S=8, hidden=32) -------------------------
    B, S = 2, 8
    input_size, output_size = 32, 32
    k_w, k_info, k_hold, key = jax.random.split(key, 4)
    weight = jax.random.uniform(k_w, (output_size, input_size), jnp.float32,
                                minval=-initrange, maxval=initrange)
    bias = jnp.zeros((output_size,), jnp.float32)
    info = jax.random.normal(k_info, (B, S, input_size), jnp.float32)
    holder = jax.random.randint(k_hold, (B, S), 0, 3).astype(jnp.int32)

    holder_out, info_out = linear_layer_forward(holder, info, weight, bias)
    info_out = jax.block_until_ready(info_out)
    ref = _reference(holder, info, weight, bias)
    assert jnp.allclose(info_out, ref, atol=1e-5, rtol=1e-5)
    assert jnp.array_equal(holder_out, holder)

    # --- Test 2: module default sizes (200/200), ragged + multi-tile M ------
    B2, S2 = 4, 160                       # M = 640 -> two 512-row tiles (padded)
    in2, out2 = 200, 200                  # ragged K/N -> padded to 256
    k_w2, k_info2, k_hold2, key = jax.random.split(key, 4)
    weight2 = jax.random.uniform(k_w2, (out2, in2), jnp.float32,
                                 minval=-initrange, maxval=initrange)
    bias2 = jnp.zeros((out2,), jnp.float32)
    info2 = jax.random.normal(k_info2, (B2, S2, in2), jnp.float32)
    holder2 = jax.random.randint(k_hold2, (B2, S2), 0, 3).astype(jnp.int32)

    holder2_out, info2_out = linear_layer_forward(holder2, info2, weight2, bias2)
    info2_out = jax.block_until_ready(info2_out)
    ref2 = _reference(holder2, info2, weight2, bias2)
    assert jnp.allclose(info2_out, ref2, atol=1e-4, rtol=1e-4)
    assert jnp.array_equal(holder2_out, holder2)

    print("KERNEL_OK")
</pallas_src>

<mosaic_0001>
module attributes {stable_mosaic.version = 11 : i64} {
  func.func @_linear_mask_kernel(%arg0: i32, %arg1: i32, %arg2: i32, %arg3: memref<16x128xf32, #tpu.memory_space<vmem>>, %arg4: memref<128x128xf32, #tpu.memory_space<vmem>>, %arg5: memref<1x128xf32, #tpu.memory_space<vmem>>, %arg6: memref<16x1xi32, #tpu.memory_space<vmem>>, %arg7: memref<16x128xf32, #tpu.memory_space<vmem>>, %arg8: memref<16x128xf32, #tpu.memory_space<vmem>>) attributes {dimension_semantics = [#tpu.dimension_semantics<parallel>, #tpu.dimension_semantics<parallel>, #tpu.dimension_semantics<arbitrary>], iteration_bounds = array<i64: 1, 1, 1>, scalar_prefetch = 0 : i64, scratch_operands = 1 : i64, tpu.core_type = #tpu.core_type<tc>, window_params = [{transform_indices = @transform_0, window_bounds = array<i64: 16, 128>}, {transform_indices = @transform_1, window_bounds = array<i64: 128, 128>}, {transform_indices = @transform_2, window_bounds = array<i64: 1, 128>}, {transform_indices = @transform_3, window_bounds = array<i64: 16, 1>}, {transform_indices = @transform_4, window_bounds = array<i64: 16, 128>}]} {
    %c0_i32 = arith.constant 0 : i32
    %0 = arith.cmpi eq, %arg2, %c0_i32 : i32
    %1 = arith.extui %0 : i1 to i32
    %c0_i32_0 = arith.constant 0 : i32
    %2 = arith.cmpi ne, %1, %c0_i32_0 : i32
    scf.if %2 {
      %c0_10 = arith.constant 0 : index
      %c0_11 = arith.constant 0 : index
      %12 = vector.load %arg5[%c0_10, %c0_11] : memref<1x128xf32, #tpu.memory_space<vmem>>, vector<1x128xf32>
      %13 = vector.shape_cast %12 : vector<1x128xf32> to vector<1x128xf32>
      %14 = vector.broadcast %13 : vector<1x128xf32> to vector<16x128xf32>
      %c0_12 = arith.constant 0 : index
      %c0_13 = arith.constant 0 : index
      %15 = vector.load %arg8[%c0_12, %c0_13] : memref<16x128xf32, #tpu.memory_space<vmem>>, vector<16x128xf32>
      tpu.vector_store %arg8[%c0_12, %c0_13], %14 {strides = array<i32>} : memref<16x128xf32, #tpu.memory_space<vmem>>, vector<16x128xf32>,
    } else {
    }
    %c0 = arith.constant 0 : index
    %c0_1 = arith.constant 0 : index
    %3 = vector.load %arg8[%c0, %c0_1] : memref<16x128xf32, #tpu.memory_space<vmem>>, vector<16x128xf32>
    %c0_2 = arith.constant 0 : index
    %c0_3 = arith.constant 0 : index
    %4 = vector.load %arg3[%c0_2, %c0_3] : memref<16x128xf32, #tpu.memory_space<vmem>>, vector<16x128xf32>
    %c0_4 = arith.constant 0 : index
    %c0_5 = arith.constant 0 : index
    %5 = vector.load %arg4[%c0_4, %c0_5] : memref<128x128xf32, #tpu.memory_space<vmem>>, vector<128x128xf32>
    %cst = arith.constant dense<0.000000e+00> : vector<16x128xf32>
    %6 = tpu.matmul %4, %5, %cst {dimension_numbers = #tpu.dot_dimension_numbers<[1], [1], [0], [0], [0, 0, 1, 0], [], []>} : vector<16x128xf32>, vector<128x128xf32>, vector<16x128xf32> -> vector<16x128xf32>
    %7 = arith.addf %3, %6 : vector<16x128xf32>
    %c0_6 = arith.constant 0 : index
    %c0_7 = arith.constant 0 : index
    %8 = vector.load %arg8[%c0_6, %c0_7] : memref<16x128xf32, #tpu.memory_space<vmem>>, vector<16x128xf32>
    tpu.vector_store %arg8[%c0_6, %c0_7], %7 {strides = array<i32>} : memref<16x128xf32, #tpu.memory_space<vmem>>, vector<16x128xf32>,
    %c0_i32_8 = arith.constant 0 : i32
    %9 = arith.cmpi eq, %arg2, %c0_i32_8 : i32
    %10 = arith.extui %9 : i1 to i32
    %c0_i32_9 = arith.constant 0 : i32
    %11 = arith.cmpi ne, %10, %c0_i32_9 : i32
    scf.if %11 {
      %c0_10 = arith.constant 0 : index
      %c0_11 = arith.constant 0 : index
      %12 = vector.load %arg6[%c0_10, %c0_11] : memref<16x1xi32, #tpu.memory_space<vmem>>, vector<16x1xi32>
      %c0_i32_12 = arith.constant 0 : i32
      %13 = vector.broadcast %c0_i32_12 : i32 to vector<16x1xi32>
      %14 = arith.cmpi ne, %12, %13 : vector<16x1xi32>
      %c0_13 = arith.constant 0 : index
      %c0_14 = arith.constant 0 : index
      %15 = vector.load %arg8[%c0_13, %c0_14] : memref<16x128xf32, #tpu.memory_space<vmem>>, vector<16x128xf32>
      %cst_15 = arith.constant 0.000000e+00 : f32
      %16 = vector.shape_cast %14 : vector<16x1xi1> to vector<16x1xi1>
      %17 = vector.broadcast %16 : vector<16x1xi1> to vector<16x128xi1>
      %18 = vector.broadcast %cst_15 : f32 to vector<16x128xf32>
      %19 = arith.select %17, %15, %18 : vector<16x128xi1>, vector<16x128xf32>
      %c0_16 = arith.constant 0 : index
      %c0_17 = arith.constant 0 : index
      %20 = vector.load %arg7[%c0_16, %c0_17] : memref<16x128xf32, #tpu.memory_space<vmem>>, vector<16x128xf32>
      tpu.vector_store %arg7[%c0_16, %c0_17], %19 {strides = array<i32>} : memref<16x128xf32, #tpu.memory_space<vmem>>, vector<16x128xf32>,
    } else {
    }
    return
  }
  func.func @transform_0(%arg0: i32, %arg1: i32, %arg2: i32) -> (i32, i32) {
    %c0_i32 = arith.constant 0 : i32
    return %arg0, %arg2 : i32, i32
  }
  func.func @transform_1(%arg0: i32, %arg1: i32, %arg2: i32) -> (i32, i32) {
    %c0_i32 = arith.constant 0 : i32
    return %arg1, %arg2 : i32, i32
  }
  func.func @transform_2(%arg0: i32, %arg1: i32, %arg2: i32) -> (i32, i32) {
    %c0_i32 = arith.constant 0 : i32
    %c0_i32_0 = arith.constant 0 : i32
    return %c0_i32, %arg1 : i32, i32
  }
  func.func @transform_3(%arg0: i32, %arg1: i32, %arg2: i32) -> (i32, i32) {
    %c0_i32 = arith.constant 0 : i32
    %c0_i32_0 = arith.constant 0 : i32
    return %arg0, %c0_i32 : i32, i32
  }
  func.func @transform_4(%arg0: i32, %arg1: i32, %arg2: i32) -> (i32, i32) {
    %c0_i32 = arith.constant 0 : i32
    return %arg0, %arg1 : i32, i32
  }
}

</mosaic_0001>

<llo_original>
// kernel: tpu_custom_call.1
$region0: #{tpu_custom_call.1}
  #allocation0 [shape = 'u32[]', space=smem, size = 0x4, offset = 0x4, fixed_abs, tag = 'smem constant byte address 0x4 - core index']
  #allocation1 [shape = 'u32[72,128]{1,0:T(1,128)}', space=vmem, size = 0x9000, scoped, tag = 'internal scratch']
  #allocation2 [shape = 'f32[16,128]{1,0:T(8,128)}', space=vmem, size = 0x2000, scoped, tag = 'scratch operand']
  %s0 = inlined_call_operand.vmem [shape: f32[16,128], index: 0, kind: input, shape index: {}]
  %s1 = inlined_call_operand.hbm [shape: f32[128,128], index: 1, kind: input, shape index: {}]
  %s2 = inlined_call_operand.vmem [shape: f32[1,128], index: 2, kind: input, shape index: {}]
  %s3 = inlined_call_operand.vmem [shape: s32[16,1], index: 3, kind: input, shape index: {}]
  %s4 = inlined_call_operand.hbm [shape: f32[16,128], index: 4, kind: output, shape index: {}]
  %s5 = sld [smem:[#allocation0]]
  $region38: #{tpu_custom_call.1} parent=0
    _
  %s7 = ssub.s32 1, %s5
  %s8 = scalar_select 0, %s7, %s5
  $region1: #{tpu_custom_call.1} parent=0
    #allocation3 [shape = 'u8[65536]{0}', space=vmem, size = 0x10000, scoped, tag = 'input window, operand 1, single buffered']
    #allocation4 [shape = 's32[1]{0}', space=sflag, size = 0x4, scoped, tag = 'scoped memory for tpu_custom_call.1']
    #allocation5 [shape = 's32[1]{0}', space=sflag, size = 0x4, scoped, tag = 'scoped memory for tpu_custom_call.1']
    #allocation6 [shape = 'u8[8192]{0}', space=vmem, size = 0x2000, scoped, tag = 'output window, operand 0, single buffered']
    %9 = vsyncpa [#allocation4], 0
    %10 = vsyncpa [#allocation5], 0
    // Predicated region
    $region2: #{tpu_custom_call.1} parent=1 // pred_check
      _
    $region3: #{tpu_custom_call.1} parent=1 // pred_check_branch
      %12 = sbr.rel (0) target = $region5
    $region4: #{tpu_custom_call.1} parent=1 // pred_region
      _
    $region5: #{tpu_custom_call.1} parent=1 // pred_fallthru
      _
    // Predicated region
    $region6: #{tpu_custom_call.1} parent=1 // pred_check
      _
    $region7: #{tpu_custom_call.1} parent=1 // pred_check_branch
      %14 = sbr.rel (0) target = $region9
    $region8: #{tpu_custom_call.1} parent=1 // pred_region
      %16 = vsyncadd [#allocation4], 0
      %s17 = sshll.u32 %s1, 4
      %s18 = int_to_ptr.hbm [resolvable:$true] %s17
      %s19 = sshll.u32 [#allocation3], 4
      %s20 = int_to_ptr.vmem [resolvable:$true] %s19
      %25 = dma.hbm_to_vmem [thread:$0]  %s18, 2048, %s20, [#allocation4], 128, 128, 8
    $region9: #{tpu_custom_call.1} parent=1 // pred_fallthru
      _
    // Predicated region
    $region10: #{tpu_custom_call.1} parent=1 // pred_check
      _
    $region11: #{tpu_custom_call.1} parent=1 // pred_check_branch
      %27 = sbr.rel (0) target = $region13
    $region12: #{tpu_custom_call.1} parent=1 // pred_region
      _
    $region13: #{tpu_custom_call.1} parent=1 // pred_fallthru
      _
    // Predicated region
    $region14: #{tpu_custom_call.1} parent=1 // pred_check
      _
    $region15: #{tpu_custom_call.1} parent=1 // pred_check_branch
      %29 = sbr.rel (0) target = $region17
    $region16: #{tpu_custom_call.1} parent=1 // pred_region
      _
    $region17: #{tpu_custom_call.1} parent=1 // pred_fallthru
      _
    // Predicated region
    $region18: #{tpu_custom_call.1} parent=1 // pred_check
      _
    $region19: #{tpu_custom_call.1} parent=1 // pred_check_branch
      %31 = sbr.rel (0) target = $region21
    $region20: #{tpu_custom_call.1} parent=1 // pred_region
      %33 = dma.done [#allocation4], 2048
    $region21: #{tpu_custom_call.1} parent=1 // pred_fallthru
      _
    %p34 = scmp.eq.s32.totalorder 0, 0
    // Predicated region
    $region22: #{tpu_custom_call.1} parent=1 // pred_check
      %p35 = pneg %p34
    $region23: #{tpu_custom_call.1} parent=1 // pred_check_branch
      %37 = sbr.rel (%p35) target = $region25
    $region24: #{tpu_custom_call.1} parent=1 // pred_region
      %v38 = vld [vmem:[%s2] sm:$0x1]
      %v40 = vperm.slane %v38, 0
      %42 = vst [vmem:[#allocation2] sm:$0xff] %v40
      %43 = vst [vmem:[#allocation2 + $0x8] sm:$0xff] %v40
    $region25: #{tpu_custom_call.1} parent=1 // pred_fallthru
      _
    %v44 = vld [vmem:[#allocation2] sm:$0xff]
    %v45 = vld [vmem:[#allocation2 + $0x8] sm:$0xff]
    %v46 = vld [vmem:[%s0] sm:$0xff]
    %v47 = vld [vmem:[%s0 + $0x8] sm:$0xff]
    %v48 = vld [vmem:[#allocation3] sm:$0xff]
    %v49 = vld [vmem:[#allocation3 + $0x8] sm:$0xff]
    %v50 = vld [vmem:[#allocation3 + $0x10] sm:$0xff]
    %v51 = vld [vmem:[#allocation3 + $0x18] sm:$0xff]
    %v52 = vld [vmem:[#allocation3 + $0x20] sm:$0xff]
    %v53 = vld [vmem:[#allocation3 + $0x28] sm:$0xff]
    %v54 = vld [vmem:[#allocation3 + $0x30] sm:$0xff]
    %v55 = vld [vmem:[#allocation3 + $0x38] sm:$0xff]
    %v56 = vld [vmem:[#allocation3 + $0x40] sm:$0xff]
    %v57 = vld [vmem:[#allocation3 + $0x48] sm:$0xff]
    %v58 = vld [vmem:[#allocation3 + $0x50] sm:$0xff]
    %v59 = vld [vmem:[#allocation3 + $0x58] sm:$0xff]
    %v60 = vld [vmem:[#allocation3 + $0x60] sm:$0xff]
    %v61 = vld [vmem:[#allocation3 + $0x68] sm:$0xff]
    %v62 = vld [vmem:[#allocation3 + $0x70] sm:$0xff]
    %v63 = vld [vmem:[#allocation3 + $0x78] sm:$0xff]
    %64 = vmatpush.xpose.msra.mxu0 %v63
    %65 = vmatpush.xpose.msra.mxu0 %v62
    %66 = vmatpush.xpose.msra.mxu0 %v61
    %67 = vmatpush.xpose.msra.mxu0 %v60
    %68 = vmatpush.xpose.msra.mxu0 %v59
    %69 = vmatpush.xpose.msra.mxu0 %v58
    %70 = vmatpush.xpose.msra.mxu0 %v57
    %71 = vmatpush.xpose.msra.mxu0 %v56
    %72 = vmatpush.xpose.msra.mxu0 %v55
    %73 = vmatpush.xpose.msra.mxu0 %v54
    %74 = vmatpush.xpose.msra.mxu0 %v53
    %75 = vmatpush.xpose.msra.mxu0 %v52
    %76 = vmatpush.xpose.msra.mxu0 %v51
    %77 = vmatpush.xpose.msra.mxu0 %v50
    %78 = vmatpush.xpose.msra.mxu0 %v49
    %79 = vmatpush.xpose.msra.mxu0 %v48
    %80 = vmatmul.f32.gmra.mxu0 %v46
    %v81 = vpop.f32.mrf.mxu0
    %v82 = vadd.f32 0.0, %v81
    %83 = vmatmul.f32.gmra.mxu0 %v47
    %v84 = vpop.f32.mrf.mxu0
    %v85 = vadd.f32 0.0, %v84
    %86 = vdwg.mxu0
    %v87 = vadd.f32 %v44, %v82
    %v88 = vadd.f32 %v45, %v85
    %89 = vst [vmem:[#allocation2] sm:$0xff] %v87
    %90 = vst [vmem:[#allocation2 + $0x8] sm:$0xff] %v88
    // Predicated region
    $region26: #{tpu_custom_call.1} parent=1 // pred_check
      %p91 = pneg %p34
    $region27: #{tpu_custom_call.1} parent=1 // pred_check_branch
      %93 = sbr.rel (%p91) target = $region29
    $region28: #{tpu_custom_call.1} parent=1 // pred_region
      %v94 = vld [vmem:[%s3] sm:$0xff]
      %v95 = vld [vmem:[%s3 + $0x8] sm:$0xff]
      %vm96 = vcmp.ne.s32.totalorder %v94, 0
      %vm97 = vcmp.ne.s32.totalorder %v95, 0
      %v98 = vld [vmem:[#allocation2] sm:$0xff]
      %v99 = vld [vmem:[#allocation2 + $0x8] sm:$0xff]
      %v100 = vsel %vm96, 1, 0
      %v101 = vsel %vm97, 1, 0
      %102 = vset.pattern.permute.xlu0 0
      %103 = vperm.xlu0 %102, %v100
      %v104 = vpop.permute.xlu0 %103
      %105 = vset.pattern.permute.xlu0 0
      %106 = vperm.xlu0 %105, %v101
      %v107 = vpop.permute.xlu0 %106
      %vm108 = vcmp.eq.s32.totalorder %v104, 1
      %vm109 = vcmp.eq.s32.totalorder %v107, 1
      %v110 = vsel %vm108, %v98, 0.0
      %v111 = vsel %vm109, %v99, 0.0
      %112 = vst [vmem:[#allocation6] sm:$0xff] %v110
      %113 = vst [vmem:[#allocation6 + $0x8] sm:$0xff] %v111
    $region29: #{tpu_custom_call.1} parent=1 // pred_fallthru
      _
    // Predicated region
    $region30: #{tpu_custom_call.1} parent=1 // pred_check
      _
    $region31: #{tpu_custom_call.1} parent=1 // pred_check_branch
      %115 = sbr.rel (0) target = $region33
    $region32: #{tpu_custom_call.1} parent=1 // pred_region
      %117 = vsyncadd [#allocation5], 0
      %s118 = sshll.u32 [#allocation6], 4
      %s119 = int_to_ptr.vmem [resolvable:$true] %s118
      %s120 = sshll.u32 %s4, 4
      %s121 = int_to_ptr.hbm [resolvable:$true] %s120
      %126 = dma.vmem_to_hbm [thread:$0]  %s119, 256, %s121, [#allocation5], 128, 128, 8
    $region33: #{tpu_custom_call.1} parent=1 // pred_fallthru
      _
    // Predicated region
    $region34: #{tpu_custom_call.1} parent=1 // pred_check
      _
    $region35: #{tpu_custom_call.1} parent=1 // pred_check_branch
      %128 = sbr.rel (0) target = $region37
    $region36: #{tpu_custom_call.1} parent=1 // pred_region
      %130 = dma.done [#allocation5], 256
    $region37: #{tpu_custom_call.1} parent=1 // pred_fallthru
      _
    %131 = vsyncpa [#allocation4], 1
    %132 = vsyncpa [#allocation5], 1

</llo_original>
